<compile_context>
chip_gen: v6e
topology: v6e:2x2x1
jax: 0.10.0
libtpu: 0.0.40
codegen_flags: <defaults>
</compile_context>

<pallas_src>
import math
import functools

import jax
import jax.numpy as jnp
from jax import lax
from jax.experimental import pallas as pl
from jax.experimental.pallas import tpu as pltpu


# --------------------------------------------------------------------------
# Kernel 1: fused KQV projection (all heads), lane-dense outputs.
# --------------------------------------------------------------------------
def _kqv_proj_kernel(x_ref, w_ref, b_ref, k_ref, q_ref, v_ref):
    x = x_ref[0]                                   # (tm, D) compute dtype
    for idx, out_ref in enumerate((k_ref, q_ref, v_ref)):
        y = jnp.dot(x, w_ref[idx], preferred_element_type=jnp.float32) + b_ref[idx]
        out_ref[0] = y.astype(out_ref.dtype)


# --------------------------------------------------------------------------
# Kernel 2: flash-style causal attention + fused output projection.
# --------------------------------------------------------------------------
def _flash_attn_proj_kernel(q_ref, k_ref, v_ref, wp_ref, bp_ref, o_ref,
                            m_ref, l_ref, acc_ref, *, n_heads, compute_dtype):
    _, tq, D = q_ref.shape
    _, tk, _ = k_ref.shape
    H = n_heads
    hd = D // H

    qi = pl.program_id(1)
    ki = pl.program_id(2)
    n_kv = pl.num_programs(2)

    @pl.when(ki == 0)
    def _init():
        m_ref[...] = jnp.full_like(m_ref, -1e30)
        l_ref[...] = jnp.zeros_like(l_ref)
        acc_ref[...] = jnp.zeros_like(acc_ref)

    q_start = qi * tq
    kv_start = ki * tk
    q_last = q_start + (tq - 1)
    kv_last = kv_start + (tk - 1)

    def _online_update(apply_mask):
        q = q_ref[0]                               # (tq, D) compute dtype
        k = k_ref[0]                               # (tk, D)
        v = v_ref[0]                               # (tk, D)
        if apply_mask:
            rows = q_start + lax.broadcasted_iota(jnp.int32, (tq, tk), 0)
            cols = kv_start + lax.broadcasted_iota(jnp.int32, (tq, tk), 1)
            visible = rows >= cols                 # single 2-D mask, shared by heads
        for h in range(H):                         # static lane slices per head
            sl = slice(h * hd, (h + 1) * hd)
            s = lax.dot_general(q[:, sl], k[:, sl],
                                (((1,), (1,)), ((), ())),
                                preferred_element_type=jnp.float32)      # (tq, tk) f32
            if apply_mask:
                s = jnp.where(visible, s, -1e30)
            m_prev = m_ref[h]                                            # (tq, 1)
            m_new = jnp.maximum(m_prev, jnp.max(s, axis=-1, keepdims=True))
            alpha = jnp.exp(m_prev - m_new)
            p = jnp.exp(s - m_new)                                       # unnormalised
            l_ref[h] = alpha * l_ref[h] + jnp.sum(p, axis=-1, keepdims=True)
            acc_ref[h] = alpha * acc_ref[h] + jnp.dot(
                p.astype(compute_dtype), v[:, sl],
                preferred_element_type=jnp.float32)                      # (tq, hd)
            m_ref[h] = m_new

    # Tile fully below the diagonal: no masking needed.
    @pl.when(kv_last <= q_start)
    def _full_tile():
        _online_update(apply_mask=False)

    # Diagonal tile: apply the 2-D causal mask.
    @pl.when(jnp.logical_and(kv_last > q_start, kv_start <= q_last))
    def _diag_tile():
        _online_update(apply_mask=True)

    # Tiles with kv_start > q_last are entirely masked -> skipped (no MXU/EUP work).

    @pl.when(ki == n_kv - 1)
    def _finalize():
        inv_l = pl.reciprocal(l_ref[...], approx=True)   # (H, tq, 1), EUP slot
        heads = acc_ref[...] * inv_l                     # deferred normalisation
        sa = jnp.transpose(heads, (1, 0, 2)).reshape(tq, D)   # one relayout per q tile
        out = jnp.dot(sa.astype(compute_dtype), wp_ref[...],
                      preferred_element_type=jnp.float32) + bp_ref[...]
        o_ref[0] = out.astype(o_ref.dtype)


# --------------------------------------------------------------------------
# Wrapper
# --------------------------------------------------------------------------
def _fit_tile(n, target):
    """Largest tile <= target that divides n (prefers multiples of 8)."""
    if n <= target:
        return n
    best = None
    for t in range(min(n, target), 0, -1):
        if n % t == 0:
            if t % 8 == 0:
                return t
            if best is None:
                best = t
    return best or n


def causal_self_attention(x, w_kqv, b_kqv, w_proj, b_proj, *,
                          compute_dtype=jnp.bfloat16,
                          q_tile=128, kv_tile=128, kqv_row_tile=256):
    """x:(B,N,D); w_kqv:(H,3*hd,D); b_kqv:(H,1,3*hd); w_proj:(D,D); b_proj:(1,D).

    The causal mask is generated in-kernel (equivalent to the module's tril
    buffer sliced to (N, N)).  Dropout is identity (eval mode).
    """
    B, N, D = x.shape
    H, three_hd, D_in = w_kqv.shape
    hd = three_hd // 3
    assert D_in == D and H * hd == D

    f32 = jnp.float32
    # One-time weight fusion / pre-transpose / pre-scale (hoist under jit in
    # real use so it is not repeated per call).  Kind order: (k, q, v).
    w = w_kqv.reshape(H, 3, hd, D).transpose(1, 0, 2, 3).reshape(3, D, D)  # (kind,out,in)
    w_t = jnp.swapaxes(w, 1, 2).astype(f32)                                # (kind,in,out)
    b = b_kqv.reshape(H, 3, hd).transpose(1, 0, 2).reshape(3, 1, D).astype(f32)
    scale = 1.0 / math.sqrt(hd)
    w_t = w_t.at[1].multiply(scale)          # fold 1/sqrt(hd) into Q weight
    b = b.at[1].multiply(scale)              # and Q bias
    w_t = w_t.astype(compute_dtype)          # HBM-side cast (halves DMA bytes)
    wp_t = w_proj.T.astype(compute_dtype)
    bp = b_proj.astype(f32)
    x_c = x.astype(compute_dtype)

    esize = jnp.dtype(compute_dtype).itemsize

    # ---------------- Kernel 1: KQV projection ----------------
    tm = _fit_tile(N, kqv_row_tile)
    kqv_shape = jax.ShapeDtypeStruct((B, N, D), compute_dtype)
    k_all, q_all, v_all = pl.pallas_call(
        _kqv_proj_kernel,
        out_shape=(kqv_shape, kqv_shape, kqv_shape),
        grid=(B, N // tm),
        in_specs=[
            pl.BlockSpec((1, tm, D), lambda bb, i: (bb, i, 0)),
            pl.BlockSpec((3, D, D), lambda bb, i: (0, 0, 0)),
            pl.BlockSpec((3, 1, D), lambda bb, i: (0, 0, 0)),
        ],
        out_specs=(
            pl.BlockSpec((1, tm, D), lambda bb, i: (bb, i, 0)),
            pl.BlockSpec((1, tm, D), lambda bb, i: (bb, i, 0)),
            pl.BlockSpec((1, tm, D), lambda bb, i: (bb, i, 0)),
        ),
        compiler_params=pltpu.CompilerParams(
            dimension_semantics=("parallel", "parallel"),
            vmem_limit_bytes=64 * 1024 * 1024),
        cost_estimate=pl.CostEstimate(
            flops=int(2 * B * N * D * 3 * D),
            transcendentals=0,
            bytes_accessed=int(B * N * D * esize + 3 * D * D * esize
                               + 3 * D * 4 + 3 * B * N * D * esize)),
    )(x_c, w_t, b)

    # ---------------- Kernel 2: flash attention + projection ----------------
    tq = _fit_tile(N, q_tile)
    tk = _fit_tile(N, kv_tile)
    n_q, n_kv = N // tq, N // tk

    attn_cost = pl.CostEstimate(
        flops=int(4 * B * H * N * N * hd + 2 * B * N * D * D),
        transcendentals=int(B * H * N * N),
        bytes_accessed=int(B * n_q * n_kv * (tq + 2 * tk) * D * esize
                           + D * D * esize + D * 4 + B * N * D * 4))

    kernel = functools.partial(_flash_attn_proj_kernel,
                               n_heads=H, compute_dtype=compute_dtype)
    out = pl.pallas_call(
        kernel,
        out_shape=jax.ShapeDtypeStruct((B, N, D), jnp.float32),
        grid=(B, n_q, n_kv),
        in_specs=[
            pl.BlockSpec((1, tq, D), lambda bb, qi, ki: (bb, qi, 0)),   # Q (q tile)
            pl.BlockSpec((1, tk, D), lambda bb, qi, ki: (bb, ki, 0)),   # K (kv tile)
            pl.BlockSpec((1, tk, D), lambda bb, qi, ki: (bb, ki, 0)),   # V (kv tile)
            pl.BlockSpec((D, D), lambda bb, qi, ki: (0, 0)),            # W_proj^T (invariant)
            pl.BlockSpec((1, D), lambda bb, qi, ki: (0, 0)),            # b_proj  (invariant)
        ],
        out_specs=pl.BlockSpec((1, tq, D), lambda bb, qi, ki: (bb, qi, 0)),  # lane-dense
        scratch_shapes=[
            pltpu.VMEM((H, tq, 1), jnp.float32),    # m  (running max)
            pltpu.VMEM((H, tq, 1), jnp.float32),    # l  (running denom)
            pltpu.VMEM((H, tq, hd), jnp.float32),   # acc
        ],
        compiler_params=pltpu.CompilerParams(
            dimension_semantics=("parallel", "parallel", "arbitrary"),
            vmem_limit_bytes=64 * 1024 * 1024),
        cost_estimate=attn_cost,
    )(q_all, k_all, v_all, wp_t, bp)
    return out


# --------------------------------------------------------------------------
# Pure-JAX reference matching the PyTorch module's forward (eval mode).
# --------------------------------------------------------------------------
def reference(x, w_kqv, b_kqv, w_proj, b_proj, max_context_len):
    B, N, D = x.shape
    H, three_hd, _ = w_kqv.shape
    hd = three_hd // 3
    mask = jnp.tril(jnp.ones((1, max_context_len, max_context_len), jnp.float32))
    outs = []
    for h in range(H):
        kqv = x @ w_kqv[h].T + b_kqv[h][0]
        k, q, v = kqv[..., :hd], kqv[..., hd:2 * hd], kqv[..., 2 * hd:]
        att = q @ jnp.swapaxes(k, 1, 2) / math.sqrt(hd)
        m = mask[0, :N, :N]
        att = jnp.where(m == 0, -jnp.inf, att)
        p = jax.nn.softmax(att, axis=-1)
        outs.append(p @ v)
    sa = jnp.concatenate(outs, axis=2)
    return sa @ w_proj.T + b_proj[0]


if __name__ == "__main__":
    # Small shapes consistent with the module: embed_dim=32, n_heads=4,
    # max_context_len=16, batch=2, seq=8.
    B, N, D, H, MAXCTX = 2, 8, 32, 4, 16
    hd = D // H

    key = jax.random.PRNGKey(0)
    k1, k2, k3, k4, k5 = jax.random.split(key, 5)

    x = jax.random.normal(k1, (B, N, D), dtype=jnp.float32)
    w_kqv = 0.1 * jax.random.normal(k2, (H, 3 * hd, D), dtype=jnp.float32)
    b_kqv = 0.1 * jax.random.normal(k3, (H, 1, 3 * hd), dtype=jnp.float32)
    w_proj = 0.1 * jax.random.normal(k4, (D, D), dtype=jnp.float32)
    b_proj = 0.1 * jax.random.normal(k5, (1, D), dtype=jnp.float32)

    ref = reference(x, w_kqv, b_kqv, w_proj, b_proj, MAXCTX)

    # f32 path (exactness check).
    out_f32 = jax.block_until_ready(causal_self_attention(
        x, w_kqv, b_kqv, w_proj, b_proj, compute_dtype=jnp.float32))
    assert out_f32.shape == (B, N, D)
    assert jnp.allclose(out_f32, ref, atol=2e-3, rtol=2e-3), "f32 mismatch vs reference"

    # bf16 MXU-operand / bf16-storage fast path (default).
    out_bf16 = jax.block_until_ready(causal_self_attention(
        x, w_kqv, b_kqv, w_proj, b_proj, compute_dtype=jnp.bfloat16))
    assert jnp.allclose(out_bf16, ref, atol=7.5e-2, rtol=7.5e-2), "bf16 mismatch vs reference"

    print("KERNEL_OK")
</pallas_src>

<mosaic_0001>
module attributes {stable_mosaic.version = 11 : i64} {
  func.func @_kqv_proj_kernel(%arg0: i32, %arg1: i32, %arg2: memref<1x8x32xf32, #tpu.memory_space<vmem>>, %arg3: memref<3x32x32xf32, #tpu.memory_space<vmem>>, %arg4: memref<3x1x32xf32, #tpu.memory_space<vmem>>, %arg5: memref<1x8x32xf32, #tpu.memory_space<vmem>>, %arg6: memref<1x8x32xf32, #tpu.memory_space<vmem>>, %arg7: memref<1x8x32xf32, #tpu.memory_space<vmem>>) attributes {dimension_semantics = [#tpu.dimension_semantics<parallel>, #tpu.dimension_semantics<parallel>], iteration_bounds = array<i64: 2, 1>, scalar_prefetch = 0 : i64, scratch_operands = 0 : i64, tpu.core_type = #tpu.core_type<tc>, window_params = [{transform_indices = @transform_0, window_bounds = array<i64: 1, 8, 32>}, {pipeline_mode = #tpu.pipeline_mode<synchronous>, transform_indices = @transform_1, window_bounds = array<i64: 3, 32, 32>}, {pipeline_mode = #tpu.pipeline_mode<synchronous>, transform_indices = @transform_2, window_bounds = array<i64: 3, 1, 32>}, {transform_indices = @transform_3, window_bounds = array<i64: 1, 8, 32>}, {transform_indices = @transform_4, window_bounds = array<i64: 1, 8, 32>}, {transform_indices = @transform_5, window_bounds = array<i64: 1, 8, 32>}]} {
    %c0 = arith.constant 0 : index
    %c0_0 = arith.constant 0 : index
    %c0_1 = arith.constant 0 : index
    %0 = vector.load %arg2[%c0, %c0_0, %c0_1] : memref<1x8x32xf32, #tpu.memory_space<vmem>>, vector<1x8x32xf32>
    %1 = vector.shape_cast %0 : vector<1x8x32xf32> to vector<8x32xf32>
    %c0_2 = arith.constant 0 : index
    %c0_3 = arith.constant 0 : index
    %c0_4 = arith.constant 0 : index
    %2 = vector.load %arg3[%c0_2, %c0_3, %c0_4] : memref<3x32x32xf32, #tpu.memory_space<vmem>>, vector<1x32x32xf32>
    %3 = vector.shape_cast %2 : vector<1x32x32xf32> to vector<32x32xf32>
    %cst = arith.constant dense<0.000000e+00> : vector<8x32xf32>
    %4 = tpu.matmul %1, %3, %cst {dimension_numbers = #tpu.dot_dimension_numbers<[1], [0], [0], [1], [0, 0, 1, 1], [], []>} : vector<8x32xf32>, vector<32x32xf32>, vector<8x32xf32> -> vector<8x32xf32>
    %c0_5 = arith.constant 0 : index
    %c0_6 = arith.constant 0 : index
    %c0_7 = arith.constant 0 : index
    %5 = vector.load %arg4[%c0_5, %c0_6, %c0_7] : memref<3x1x32xf32, #tpu.memory_space<vmem>>, vector<1x1x32xf32>
    %6 = vector.shape_cast %5 : vector<1x1x32xf32> to vector<1x32xf32>
    %7 = vector.broadcast %6 : vector<1x32xf32> to vector<8x32xf32>
    %8 = arith.addf %4, %7 : vector<8x32xf32>
    %c0_8 = arith.constant 0 : index
    %c0_9 = arith.constant 0 : index
    %c0_10 = arith.constant 0 : index
    %9 = vector.load %arg5[%c0_8, %c0_9, %c0_10] : memref<1x8x32xf32, #tpu.memory_space<vmem>>, vector<1x8x32xf32>
    %10 = vector.shape_cast %9 : vector<1x8x32xf32> to vector<8x32xf32>
    %11 = vector.shape_cast %8 : vector<8x32xf32> to vector<1x8x32xf32>
    tpu.vector_store %arg5[%c0_8, %c0_9, %c0_10], %11 {strides = array<i32>} : memref<1x8x32xf32, #tpu.memory_space<vmem>>, vector<1x8x32xf32>,
    %c1 = arith.constant 1 : index
    %c0_11 = arith.constant 0 : index
    %c0_12 = arith.constant 0 : index
    %12 = vector.load %arg3[%c1, %c0_11, %c0_12] : memref<3x32x32xf32, #tpu.memory_space<vmem>>, vector<1x32x32xf32>
    %13 = vector.shape_cast %12 : vector<1x32x32xf32> to vector<32x32xf32>
    %cst_13 = arith.constant dense<0.000000e+00> : vector<8x32xf32>
    %14 = tpu.matmul %1, %13, %cst_13 {dimension_numbers = #tpu.dot_dimension_numbers<[1], [0], [0], [1], [0, 0, 1, 1], [], []>} : vector<8x32xf32>, vector<32x32xf32>, vector<8x32xf32> -> vector<8x32xf32>
    %c1_14 = arith.constant 1 : index
    %c0_15 = arith.constant 0 : index
    %c0_16 = arith.constant 0 : index
    %15 = vector.load %arg4[%c1_14, %c0_15, %c0_16] : memref<3x1x32xf32, #tpu.memory_space<vmem>>, vector<1x1x32xf32>
    %16 = vector.shape_cast %15 : vector<1x1x32xf32> to vector<1x32xf32>
    %17 = vector.broadcast %16 : vector<1x32xf32> to vector<8x32xf32>
    %18 = arith.addf %14, %17 : vector<8x32xf32>
    %c0_17 = arith.constant 0 : index
    %c0_18 = arith.constant 0 : index
    %c0_19 = arith.constant 0 : index
    %19 = vector.load %arg6[%c0_17, %c0_18, %c0_19] : memref<1x8x32xf32, #tpu.memory_space<vmem>>, vector<1x8x32xf32>
    %20 = vector.shape_cast %19 : vector<1x8x32xf32> to vector<8x32xf32>
    %21 = vector.shape_cast %18 : vector<8x32xf32> to vector<1x8x32xf32>
    tpu.vector_store %arg6[%c0_17, %c0_18, %c0_19], %21 {strides = array<i32>} : memref<1x8x32xf32, #tpu.memory_space<vmem>>, vector<1x8x32xf32>,
    %c2 = arith.constant 2 : index
    %c0_20 = arith.constant 0 : index
    %c0_21 = arith.constant 0 : index
    %22 = vector.load %arg3[%c2, %c0_20, %c0_21] : memref<3x32x32xf32, #tpu.memory_space<vmem>>, vector<1x32x32xf32>
    %23 = vector.shape_cast %22 : vector<1x32x32xf32> to vector<32x32xf32>
    %cst_22 = arith.constant dense<0.000000e+00> : vector<8x32xf32>
    %24 = tpu.matmul %1, %23, %cst_22 {dimension_numbers = #tpu.dot_dimension_numbers<[1], [0], [0], [1], [0, 0, 1, 1], [], []>} : vector<8x32xf32>, vector<32x32xf32>, vector<8x32xf32> -> vector<8x32xf32>
    %c2_23 = arith.constant 2 : index
    %c0_24 = arith.constant 0 : index
    %c0_25 = arith.constant 0 : index
    %25 = vector.load %arg4[%c2_23, %c0_24, %c0_25] : memref<3x1x32xf32, #tpu.memory_space<vmem>>, vector<1x1x32xf32>
    %26 = vector.shape_cast %25 : vector<1x1x32xf32> to vector<1x32xf32>
    %27 = vector.broadcast %26 : vector<1x32xf32> to vector<8x32xf32>
    %28 = arith.addf %24, %27 : vector<8x32xf32>
    %c0_26 = arith.constant 0 : index
    %c0_27 = arith.constant 0 : index
    %c0_28 = arith.constant 0 : index
    %29 = vector.load %arg7[%c0_26, %c0_27, %c0_28] : memref<1x8x32xf32, #tpu.memory_space<vmem>>, vector<1x8x32xf32>
    %30 = vector.shape_cast %29 : vector<1x8x32xf32> to vector<8x32xf32>
    %31 = vector.shape_cast %28 : vector<8x32xf32> to vector<1x8x32xf32>
    tpu.vector_store %arg7[%c0_26, %c0_27, %c0_28], %31 {strides = array<i32>} : memref<1x8x32xf32, #tpu.memory_space<vmem>>, vector<1x8x32xf32>,
    return
  }
  func.func @transform_0(%arg0: i32, %arg1: i32) -> (i32, i32, i32) {
    %c0_i32 = arith.constant 0 : i32
    %c0_i32_0 = arith.constant 0 : i32
    return %arg0, %arg1, %c0_i32 : i32, i32, i32
  }
  func.func @transform_1(%arg0: i32, %arg1: i32) -> (i32, i32, i32) {
    %c0_i32 = arith.constant 0 : i32
    %c0_i32_0 = arith.constant 0 : i32
    %c0_i32_1 = arith.constant 0 : i32
    %c0_i32_2 = arith.constant 0 : i32
    return %c0_i32, %c0_i32_0, %c0_i32_1 : i32, i32, i32
  }
  func.func @transform_2(%arg0: i32, %arg1: i32) -> (i32, i32, i32) {
    %c0_i32 = arith.constant 0 : i32
    %c0_i32_0 = arith.constant 0 : i32
    %c0_i32_1 = arith.constant 0 : i32
    %c0_i32_2 = arith.constant 0 : i32
    return %c0_i32, %c0_i32_0, %c0_i32_1 : i32, i32, i32
  }
  func.func @transform_3(%arg0: i32, %arg1: i32) -> (i32, i32, i32) {
    %c0_i32 = arith.constant 0 : i32
    %c0_i32_0 = arith.constant 0 : i32
    return %arg0, %arg1, %c0_i32 : i32, i32, i32
  }
  func.func @transform_4(%arg0: i32, %arg1: i32) -> (i32, i32, i32) {
    %c0_i32 = arith.constant 0 : i32
    %c0_i32_0 = arith.constant 0 : i32
    return %arg0, %arg1, %c0_i32 : i32, i32, i32
  }
  func.func @transform_5(%arg0: i32, %arg1: i32) -> (i32, i32, i32) {
    %c0_i32 = arith.constant 0 : i32
    %c0_i32_0 = arith.constant 0 : i32
    return %arg0, %arg1, %c0_i32 : i32, i32, i32
  }
}

</mosaic_0001>

<llo_original>
// kernel: tpu_custom_call.1
$region0: #{tpu_custom_call.1}
  #allocation0 [shape = 'u32[]', space=smem, size = 0x4, offset = 0x4, fixed_abs, tag = 'smem constant byte address 0x4 - core index']
  #allocation1 [shape = 'u32[144,128]{1,0:T(1,128)}', space=vmem, size = 0x12000, scoped, tag = 'internal scratch']
  %s0 = inlined_call_operand.hbm [shape: f32[2,8,32], index: 0, kind: input, shape index: {}]
  %s1 = inlined_call_operand.hbm [shape: f32[3,32,32], index: 1, kind: input, shape index: {}]
  %s2 = inlined_call_operand.vmem [shape: f32[3,1,32], index: 2, kind: input, shape index: {}]
  %s3 = inlined_call_operand.hbm [shape: f32[2,8,32], index: 3, kind: output, shape index: {0}]
  %s4 = inlined_call_operand.hbm [shape: f32[2,8,32], index: 4, kind: output, shape index: {1}]
  %s5 = inlined_call_operand.hbm [shape: f32[2,8,32], index: 5, kind: output, shape index: {2}]
  %6 = xla_tuple %s3, %s4, %s5
  %s7 = sld [smem:[#allocation0]]
  $region69: #{tpu_custom_call.1} parent=0
    _
  %s9 = ssub.s32 1, %s7
  %s10 = scalar_select 0, %s9, %s7
  $region1: #{tpu_custom_call.1} parent=0
    #allocation2 [shape = 'u8[8192]{0}', space=vmem, size = 0x2000, scoped, tag = 'input window, operand 0']
    #allocation3 [shape = 's32[2]{0}', space=sflag, size = 0x8, scoped, tag = 'scoped memory for tpu_custom_call.1']
    #allocation4 [shape = 's32[2]{0}', space=sflag, size = 0x8, scoped, tag = 'scoped memory for tpu_custom_call.1']
    #allocation5 [shape = 'u8[49152]{0}', space=vmem, size = 0xc000, scoped, tag = 'input window, operand 1, single buffered']
    #allocation6 [shape = 's32[1]{0}', space=sflag, size = 0x4, scoped, tag = 'scoped memory for tpu_custom_call.1']
    #allocation7 [shape = 'u8[8192]{0}', space=vmem, size = 0x2000, scoped, tag = 'output window, operand 0']
    #allocation8 [shape = 'u8[8192]{0}', space=vmem, size = 0x2000, scoped, tag = 'output window, operand 1']
    #allocation9 [shape = 's32[2]{0}', space=sflag, size = 0x8, scoped, tag = 'scoped memory for tpu_custom_call.1']
    #allocation10 [shape = 'u8[8192]{0}', space=vmem, size = 0x2000, scoped, tag = 'output window, operand 2']
    %11 = vsyncpa [#allocation3], 0
    %s12 = scalar_lea.sflag [#allocation3], 1
    %13 = vsyncpa %s12, 0
    %14 = vsyncpa [#allocation6], 0
    %15 = vsyncpa [#allocation4], 0
    %s16 = scalar_lea.sflag [#allocation4], 1
    %17 = vsyncpa %s16, 0
    %18 = vsyncpa [#allocation9], 0
    %s19 = scalar_lea.sflag [#allocation9], 1
    %20 = vsyncpa %s19, 0
    loop: start=0, step=1, limit=4
    $region2: #{tpu_custom_call.1} parent=1 // loop_pre_header
      _
    $region3: #{tpu_custom_call.1} parent=1 // loop_header
      %s22 = sphi 0, %s26
      %p23 = scmp.ge.s32.totalorder %s22, 4
      %s29 = sphi 0, %s41
      %s30 = sphi 0, %s37
      %s31 = sphi 0, %s29
      %s32 = sphi 0, %s30
      %s33 = sphi 0, %s31
      %s34 = sphi 0, %s32
      %s46 = sphi 0, %s48
      %s49 = sphi 0, %s46
      %s50 = sphi 0, %s49
      %s66 = sphi 0, %s50
      %s70 = sphi 0, %s70
      %s72 = sphi 0, %s70
      %s73 = sphi 0, %s72
      %s87 = sphi 0, %s73
      %s91 = sphi 0, %s91
      %s93 = sphi 0, %s91
      %s94 = sphi 0, %s93
      %s108 = sphi 0, %s94
      %s116 = sphi 0, %s118
      %s119 = sphi 0, %s116
      %s120 = sphi 0, %s119
      %s136 = sphi 0, %s120
      %s144 = sphi 0, %s146
      %s147 = sphi 0, %s144
      %s148 = sphi 0, %s147
      %s164 = sphi 0, %s148
      %s172 = sphi 0, %s174
      %s175 = sphi 0, %s172
      %s176 = sphi 0, %s175
      %s192 = sphi 0, %s176
    $region4: #{tpu_custom_call.1} parent=1 // loop_header_branch
      %25 = sbr.rel (%p23) target = $region8
    $region5: #{tpu_custom_call.1} parent=1 // loop_body
      %s27 = ssub.s32 %s22, 1
      %s28 = ssub.s32 %s22, 2
      %s35 = sadd.s32 1, %s30
      %p36 = scmp.ge.s32.totalorder %s35, 1
      %s37 = scalar_select %p36, 0, %s35
      %s38 = sadd.s32 1, %s29
      %s39 = scalar_select %p36, %s38, %s29
      %p40 = scmp.ge.s32.totalorder %s39, 2
      %s41 = scalar_select %p40, 0, %s39
      %s42 = ssub.s32 %s29, %s41
      %s43 = ssub.s32 %s30, %s37
      %s44 = sor.u32 %s42, %s43
      %p45 = scmp.eq.s32.totalorder %s44, 0
      %s47 = sadd.s32 %s46, 1
      %s48 = scalar_select %p45, %s46, %s47
      %p51 = pneg %p45
      %p52 = scmp.eq.s32.totalorder %s22, 1
      %p53 = por %p51, %p52
      %p54 = scmp.ne.s32.totalorder %s46, %s49
      %p55 = scmp.eq.s32.totalorder %s22, 0
      %p56 = por %p54, %p55
      %p57 = scmp.ne.s32.totalorder %s46, %s49
      %p58 = scmp.eq.s32.totalorder %s27, 1
      %p59 = por %p57, %p58
      %p60 = scmp.ne.s32.totalorder %s49, %s50
      %p61 = scmp.eq.s32.totalorder %s27, 0
      %p62 = por %p60, %p61
      %p63 = scmp.ne.s32.totalorder %s49, %s50
      %p64 = scmp.eq.s32.totalorder %s28, 1
      %p65 = por %p63, %p64
      %p67 = scmp.ne.s32.totalorder %s50, %s66
      %p68 = scmp.eq.s32.totalorder %s28, 0
      %p69 = por %p67, %p68
      %s71 = sadd.s32 %s70, 1
      %p74 = scmp.eq.s32.totalorder %s22, 1
      %p75 = scmp.ne.s32.totalorder %s70, %s72
      %p76 = scmp.eq.s32.totalorder %s22, 0
      %p77 = por %p75, %p76
      %p78 = scmp.ne.s32.totalorder %s70, %s72
      %p79 = scmp.eq.s32.totalorder %s27, 1
      %p80 = por %p78, %p79
      %p81 = scmp.ne.s32.totalorder %s72, %s73
      %p82 = scmp.eq.s32.totalorder %s27, 0
      %p83 = por %p81, %p82
      %p84 = scmp.ne.s32.totalorder %s72, %s73
      %p85 = scmp.eq.s32.totalorder %s28, 1
      %p86 = por %p84, %p85
      %p88 = scmp.ne.s32.totalorder %s73, %s87
      %p89 = scmp.eq.s32.totalorder %s28, 0
      %p90 = por %p88, %p89
      %s92 = sadd.s32 %s91, 1
      %p95 = scmp.eq.s32.totalorder %s22, 1
      %p96 = scmp.ne.s32.totalorder %s91, %s93
      %p97 = scmp.eq.s32.totalorder %s22, 0
      %p98 = por %p96, %p97
      %p99 = scmp.ne.s32.totalorder %s91, %s93
      %p100 = scmp.eq.s32.totalorder %s27, 1
      %p101 = por %p99, %p100
      %p102 = scmp.ne.s32.totalorder %s93, %s94
      %p103 = scmp.eq.s32.totalorder %s27, 0
      %p104 = por %p102, %p103
      %p105 = scmp.ne.s32.totalorder %s93, %s94
      %p106 = scmp.eq.s32.totalorder %s28, 1
      %p107 = por %p105, %p106
      %p109 = scmp.ne.s32.totalorder %s94, %s108
      %p110 = scmp.eq.s32.totalorder %s28, 0
      %p111 = por %p109, %p110
      %s112 = ssub.s32 %s29, %s41
      %s113 = ssub.s32 %s30, %s37
      %s114 = sor.u32 %s112, %s113
      %p115 = scmp.eq.s32.totalorder %s114, 0
      %s117 = sadd.s32 %s116, 1
      %s118 = scalar_select %p115, %s116, %s117
      %p121 = pneg %p115
      %p122 = scmp.eq.s32.totalorder %s22, 1
      %p123 = por %p121, %p122
      %p124 = scmp.ne.s32.totalorder %s116, %s119
      %p125 = scmp.eq.s32.totalorder %s22, 0
      %p126 = por %p124, %p125
      %p127 = scmp.ne.s32.totalorder %s116, %s119
      %p128 = scmp.eq.s32.totalorder %s27, 1
      %p129 = por %p127, %p128
      %p130 = scmp.ne.s32.totalorder %s119, %s120
      %p131 = scmp.eq.s32.totalorder %s27, 0
      %p132 = por %p130, %p131
      %p133 = scmp.ne.s32.totalorder %s119, %s120
      %p134 = scmp.eq.s32.totalorder %s28, 1
      %p135 = por %p133, %p134
      %p137 = scmp.ne.s32.totalorder %s120, %s136
      %p138 = scmp.eq.s32.totalorder %s28, 0
      %p139 = por %p137, %p138
      %s140 = ssub.s32 %s29, %s41
      %s141 = ssub.s32 %s30, %s37
      %s142 = sor.u32 %s140, %s141
      %p143 = scmp.eq.s32.totalorder %s142, 0
      %s145 = sadd.s32 %s144, 1
      %s146 = scalar_select %p143, %s144, %s145
      %p149 = pneg %p143
      %p150 = scmp.eq.s32.totalorder %s22, 1
      %p151 = por %p149, %p150
      %p152 = scmp.ne.s32.totalorder %s144, %s147
      %p153 = scmp.eq.s32.totalorder %s22, 0
      %p154 = por %p152, %p153
      %p155 = scmp.ne.s32.totalorder %s144, %s147
      %p156 = scmp.eq.s32.totalorder %s27, 1
      %p157 = por %p155, %p156
      %p158 = scmp.ne.s32.totalorder %s147, %s148
      %p159 = scmp.eq.s32.totalorder %s27, 0
      %p160 = por %p158, %p159
      %p161 = scmp.ne.s32.totalorder %s147, %s148
      %p162 = scmp.eq.s32.totalorder %s28, 1
      %p163 = por %p161, %p162
      %p165 = scmp.ne.s32.totalorder %s148, %s164
      %p166 = scmp.eq.s32.totalorder %s28, 0
      %p167 = por %p165, %p166
      %s168 = ssub.s32 %s29, %s41
      %s169 = ssub.s32 %s30, %s37
      %s170 = sor.u32 %s168, %s169
      %p171 = scmp.eq.s32.totalorder %s170, 0
      %s173 = sadd.s32 %s172, 1
      %s174 = scalar_select %p171, %s172, %s173
      %p177 = pneg %p171
      %p178 = scmp.eq.s32.totalorder %s22, 1
      %p179 = por %p177, %p178
      %p180 = scmp.ne.s32.totalorder %s172, %s175
      %p181 = scmp.eq.s32.totalorder %s22, 0
      %p182 = por %p180, %p181
      %p183 = scmp.ne.s32.totalorder %s172, %s175
      %p184 = scmp.eq.s32.totalorder %s27, 1
      %p185 = por %p183, %p184
      %p186 = scmp.ne.s32.totalorder %s175, %s176
      %p187 = scmp.eq.s32.totalorder %s27, 0
      %p188 = por %p186, %p187
      %p189 = scmp.ne.s32.totalorder %s175, %s176
      %p190 = scmp.eq.s32.totalorder %s28, 1
      %p191 = por %p189, %p190
      %p193 = scmp.ne.s32.totalorder %s176, %s192
      %p194 = scmp.eq.s32.totalorder %s28, 0
      %p195 = por %p193, %p194
      %p196 = scmp.le.s32.totalorder 1, %s22
      %p197 = scmp.lt.s32.totalorder %s22, 3
      %p198 = pnand %p196, %p197
      %p199 = pneg %p198
      // Predicated region
      $region9: #{tpu_custom_call.1} parent=5 // pred_check
        _
      $region10: #{tpu_custom_call.1} parent=5 // pred_check_branch
        %201 = sbr.rel (%p198) target = $region12
      $region11: #{tpu_custom_call.1} parent=5 // pred_region
        %s202 = ssub.s32 %s22, 1
        // Predicated region
        $region13: #{tpu_custom_call.1} parent=11 // pred_check
          %p203 = pneg %p83
        $region14: #{tpu_custom_call.1} parent=11 // pred_check_branch
          %205 = sbr.rel (%p203) target = $region16
        $region15: #{tpu_custom_call.1} parent=11 // pred_region
          %s207 = ssub.s32 1536, 1536
          %208 = vsyncadd [#allocation6], %s207
          %s209 = sshll.u32 [#allocation5], 4
          %s210 = int_to_ptr.vmem [resolvable:$true] %s209
          %215 = dma.hbm_to_vmem [thread:$0]  %s1, 1536, %s210, [#allocation6], 128, 128, 8
        $region16: #{tpu_custom_call.1} parent=11 // pred_fallthru
          _
        // Predicated region
        $region17: #{tpu_custom_call.1} parent=11 // pred_check
          %p216 = pneg %p104
        $region18: #{tpu_custom_call.1} parent=11 // pred_check_branch
          %218 = sbr.rel (%p216) target = $region20
        $region19: #{tpu_custom_call.1} parent=11 // pred_region
          _
        $region20: #{tpu_custom_call.1} parent=11 // pred_fallthru
          _
      $region12: #{tpu_custom_call.1} parent=5 // pred_fallthru
        _
      %p219 = scmp.lt.s32.totalorder %s22, 2
      // Predicated region
      $region21: #{tpu_custom_call.1} parent=5 // pred_check
        %p220 = pneg %p219
      $region22: #{tpu_custom_call.1} parent=5 // pred_check_branch
        %222 = sbr.rel (%p220) target = $region24
      $region23: #{tpu_custom_call.1} parent=5 // pred_region
        // Predicated region
        $region25: #{tpu_custom_call.1} parent=23 // pred_check
          %p223 = pneg %p56
        $region26: #{tpu_custom_call.1} parent=23 // pred_check_branch
          %225 = sbr.rel (%p223) target = $region28
        $region27: #{tpu_custom_call.1} parent=23 // pred_region
          %s226 = sand.u32 %s46, 1
          %s227 = scalar_lea.sflag [#allocation3], %s226
          %s228 = sand.u32 %s46, 1
          %s229 = smul.addr %s228, 8
          %s230 = scalar_lea.vmem [#allocation2], %s229
          %s232 = ssub.s32 128, 128
          %233 = vsyncadd %s227, %s232
          %s234 = sadd.s32 %s30, %s29
          %s235 = smul.addr %s234, 128
          %s236 = scalar_lea.hbm %s0, %s235
          %s238 = sshll.u32 %s230, 4
          %s239 = int_to_ptr.vmem [resolvable:$true] %s238
          %241 = dma.hbm_to_vmem [thread:$0]  %s236, 128, %s239, %s227
        $region28: #{tpu_custom_call.1} parent=23 // pred_fallthru
          _
      $region24: #{tpu_custom_call.1} parent=5 // pred_fallthru
        _
      %p242 = scmp.le.s32.totalorder 1, %s22
      %p243 = scmp.lt.s32.totalorder %s22, 3
      %p244 = pnand %p242, %p243
      %p245 = pneg %p244
      // Predicated region
      $region29: #{tpu_custom_call.1} parent=5 // pred_check
        _
      $region30: #{tpu_custom_call.1} parent=5 // pred_check_branch
        %247 = sbr.rel (%p244) target = $region32
      $region31: #{tpu_custom_call.1} parent=5 // pred_region
        %s248 = ssub.s32 %s22, 1
        %s249 = sand.u32 %s49, 1
        %s250 = scalar_lea.sflag [#allocation3], %s249
        %s251 = sand.u32 %s49, 1
        %s252 = smul.addr %s251, 8
        %s253 = scalar_lea.vmem [#allocation2], %s252
        // Predicated region
        $region33: #{tpu_custom_call.1} parent=31 // pred_check
          %p254 = pneg %p62
        $region34: #{tpu_custom_call.1} parent=31 // pred_check_branch
          %256 = sbr.rel (%p254) target = $region36
        $region35: #{tpu_custom_call.1} parent=31 // pred_region
          %257 = dma.done %s250, 128
        $region36: #{tpu_custom_call.1} parent=31 // pred_fallthru
          _
        // Predicated region
        $region37: #{tpu_custom_call.1} parent=31 // pred_check
          %p258 = pneg %p83
        $region38: #{tpu_custom_call.1} parent=31 // pred_check_branch
          %260 = sbr.rel (%p258) target = $region40
        $region39: #{tpu_custom_call.1} parent=31 // pred_region
          %261 = dma.done [#allocation6], 1536
        $region40: #{tpu_custom_call.1} parent=31 // pred_fallthru
          _
        %s262 = sand.u32 %s49, 1
        %s263 = scalar_lea.sflag [#allocation3], %s262
        %s264 = sand.u32 %s49, 1
        %s265 = smul.addr %s264, 8
        %s266 = scalar_lea.vmem [#allocation2], %s265
        %p267 = pneg %p62
        %p268 = pneg %p59
        %p269 = pneg %p83
        %p270 = pneg %p80
        %p271 = pneg %p104
        %p272 = pneg %p101
        %p273 = pneg %p132
        %p274 = pneg %p129
        %s275 = sand.u32 %s119, 1
        %s276 = scalar_lea.sflag [#allocation4], %s275
        %s277 = sand.u32 %s119, 1
        %s278 = smul.addr %s277, 8
        %s279 = scalar_lea.vmem [#allocation7], %s278
        %p280 = pneg %p160
        %p281 = pneg %p157
        %s282 = sand.u32 %s27, 1
        %s283 = scalar_lea.sflag [#allocation9], %s282
        %s284 = sand.u32 %s147, 1
        %s285 = smul.addr %s284, 8
        %s286 = scalar_lea.vmem [#allocation8], %s285
        %p287 = pneg %p188
        %p288 = pneg %p185
        %s289 = sand.u32 %s27, 1
        %s290 = scalar_lea.sflag [#allocation9], %s289
        %s291 = sand.u32 %s175, 1
        %s292 = smul.addr %s291, 8
        %s293 = scalar_lea.vmem [#allocation10], %s292
        %v294 = vld [vmem:[%s253] sm:$0xff]
        %v295 = vld [vmem:[#allocation5] sm:$0xff]
        %v296 = vld [vmem:[#allocation5 + $0x8] sm:$0xff]
        %v297 = vld [vmem:[#allocation5 + $0x10] sm:$0xff]
        %v298 = vld [vmem:[#allocation5 + $0x18] sm:$0xff]
        %v299 = vld [vmem:[%s2] sm:$0x1]
        %v301 = vlaneseq
        %v302 = vshrl.u32 %v301, 7
        %v303 = vsub.s32 0, %v302
        %v304 = vrot.slane %v299, %v303
        %vm306 = vcmask 261120
        %v308 = vsel %vm306, %v294, 0
        %310 = vmatprep.subr.mxu0 0.0
        %311 = vmatpush1.msra.mxu0 0.0
        %312 = vmatprep.subr.mxu0 0.0
        %313 = vmatpush1.msra.mxu0 0.0
        %314 = vmatprep.subr.mxu0 0.0
        %315 = vmatpush1.msra.mxu0 0.0
        %316 = vmatprep.subr.mxu0 0.0
        %317 = vmatpush1.msra.mxu0 0.0
        %318 = vmatprep.subr.mxu0 0.0
        %319 = vmatpush1.msra.mxu0 0.0
        %320 = vmatprep.subr.mxu0 0.0
        %321 = vmatpush1.msra.mxu0 0.0
        %322 = vmatprep.subr.mxu0 0.0
        %323 = vmatpush1.msra.mxu0 0.0
        %324 = vmatprep.subr.mxu0 0.0
        %325 = vmatpush1.msra.mxu0 0.0
        %326 = vmatprep.subr.mxu0 0.0
        %327 = vmatpush1.msra.mxu0 0.0
        %328 = vmatprep.subr.mxu0 0.0
        %329 = vmatpush1.msra.mxu0 0.0
        %330 = vmatprep.subr.mxu0 0.0
        %331 = vmatpush1.msra.mxu0 0.0
        %332 = vmatprep.subr.mxu0 0.0
        %333 = vmatpush1.msra.mxu0 0.0
        %334 = vmatprep.subr.mxu0 0.0
        %335 = vmatpush1.msra.mxu0 %v298
        %336 = vmatprep.subr.mxu0 0.0
        %337 = vmatpush1.msra.mxu0 %v297
        %338 = vmatprep.subr.mxu0 0.0
        %339 = vmatpush1.msra.mxu0 %v296
        %340 = vmatprep.subr.mxu0 0.0
        %341 = vmatpush1.msra.mxu0 %v295
        %342 = vmatprep.subr.mxu0 0.0
        %343 = vmatpush2.msra.mxu0 0.0
        %344 = vmatprep.subr.mxu0 0.0
        %345 = vmatpush2.msra.mxu0 0.0
        %346 = vmatprep.subr.mxu0 0.0
        %347 = vmatpush2.msra.mxu0 0.0
        %348 = vmatprep.subr.mxu0 0.0
        %349 = vmatpush2.msra.mxu0 0.0
        %350 = vmatprep.subr.mxu0 0.0
        %351 = vmatpush2.msra.mxu0 0.0
        %352 = vmatprep.subr.mxu0 0.0
        %353 = vmatpush2.msra.mxu0 0.0
        %354 = vmatprep.subr.mxu0 0.0
        %355 = vmatpush2.msra.mxu0 0.0
        %356 = vmatprep.subr.mxu0 0.0
        %357 = vmatpush2.msra.mxu0 0.0
        %358 = vmatprep.subr.mxu0 0.0
        %359 = vmatpush2.msra.mxu0 0.0
        %360 = vmatprep.subr.mxu0 0.0
        %361 = vmatpush2.msra.mxu0 0.0
        %362 = vmatprep.subr.mxu0 0.0
        %363 = vmatpush2.msra.mxu0 0.0
        %364 = vmatprep.subr.mxu0 0.0
        %365 = vmatpush2.msra.mxu0 0.0
        %366 = vmatprep.subr.mxu0 0.0
        %367 = vmatpush2.msra.mxu0 0.0
        %368 = vmatprep.subr.mxu0 0.0
        %369 = vmatpush2.msra.mxu0 0.0
        %370 = vmatprep.subr.mxu0 0.0
        %371 = vmatpush2.msra.mxu0 0.0
        %372 = vmatprep.subr.mxu0 0.0
        %373 = vmatpush2.msra.mxu0 0.0
        %374 = vmatprep.mubr.f32.mxu0 0.0
        %375 = vmatmul.mubr.f32.gmra.mxu0 %v308
        %v376 = vpop.f32.mrf.mxu0
        %v377 = vadd.f32 %v304, %v376
        %v378 = vpop.f32.mrf.mxu0
        %379 = vdwg.mxu0
        %380 = vst.msk [vmem:[%s279] sm:$0xff] %vm306, %v377
        %s381 = scalar_lea.vmem [#allocation5], 32
        %v382 = vld [vmem:[%s381] sm:$0xff]
        %v383 = vld [vmem:[%s381 + $0x8] sm:$0xff]
        %v384 = vld [vmem:[%s381 + $0x10] sm:$0xff]
        %v385 = vld [vmem:[%s381 + $0x18] sm:$0xff]
        %s386 = scalar_lea.vmem %s2, 1
        %v387 = vld [vmem:[%s386] sm:$0x1]
        %v389 = vlaneseq
        %v390 = vshrl.u32 %v389, 7
        %v391 = vsub.s32 0, %v390
        %v392 = vrot.slane %v387, %v391
        %394 = vmatprep.subr.mxu0 0.0
        %395 = vmatpush1.msra.mxu0 0.0
        %396 = vmatprep.subr.mxu0 0.0
        %397 = vmatpush1.msra.mxu0 0.0
        %398 = vmatprep.subr.mxu0 0.0
        %399 = vmatpush1.msra.mxu0 0.0
        %400 = vmatprep.subr.mxu0 0.0
        %401 = vmatpush1.msra.mxu0 0.0
        %402 = vmatprep.subr.mxu0 0.0
        %403 = vmatpush1.msra.mxu0 0.0
        %404 = vmatprep.subr.mxu0 0.0
        %405 = vmatpush1.msra.mxu0 0.0
        %406 = vmatprep.subr.mxu0 0.0
        %407 = vmatpush1.msra.mxu0 0.0
        %408 = vmatprep.subr.mxu0 0.0
        %409 = vmatpush1.msra.mxu0 0.0
        %410 = vmatprep.subr.mxu0 0.0
        %411 = vmatpush1.msra.mxu0 0.0
        %412 = vmatprep.subr.mxu0 0.0
        %413 = vmatpush1.msra.mxu0 0.0
        %414 = vmatprep.subr.mxu0 0.0
        %415 = vmatpush1.msra.mxu0 0.0
        %416 = vmatprep.subr.mxu0 0.0
        %417 = vmatpush1.msra.mxu0 0.0
        %418 = vmatprep.subr.mxu0 0.0
        %419 = vmatpush1.msra.mxu0 %v385
        %420 = vmatprep.subr.mxu0 0.0
        %421 = vmatpush1.msra.mxu0 %v384
        %422 = vmatprep.subr.mxu0 0.0
        %423 = vmatpush1.msra.mxu0 %v383
        %424 = vmatprep.subr.mxu0 0.0
        %425 = vmatpush1.msra.mxu0 %v382
        %426 = vmatprep.subr.mxu0 0.0
        %427 = vmatpush2.msra.mxu0 0.0
        %428 = vmatprep.subr.mxu0 0.0
        %429 = vmatpush2.msra.mxu0 0.0
        %430 = vmatprep.subr.mxu0 0.0
        %431 = vmatpush2.msra.mxu0 0.0
        %432 = vmatprep.subr.mxu0 0.0
        %433 = vmatpush2.msra.mxu0 0.0
        %434 = vmatprep.subr.mxu0 0.0
        %435 = vmatpush2.msra.mxu0 0.0
        %436 = vmatprep.subr.mxu0 0.0
        %437 = vmatpush2.msra.mxu0 0.0
        %438 = vmatprep.subr.mxu0 0.0
        %439 = vmatpush2.msra.mxu0 0.0
        %440 = vmatprep.subr.mxu0 0.0
        %441 = vmatpush2.msra.mxu0 0.0
        %442 = vmatprep.subr.mxu0 0.0
        %443 = vmatpush2.msra.mxu0 0.0
        %444 = vmatprep.subr.mxu0 0.0
        %445 = vmatpush2.msra.mxu0 0.0
        %446 = vmatprep.subr.mxu0 0.0
        %447 = vmatpush2.msra.mxu0 0.0
        %448 = vmatprep.subr.mxu0 0.0
        %449 = vmatpush2.msra.mxu0 0.0
        %450 = vmatprep.subr.mxu0 0.0
        %451 = vmatpush2.msra.mxu0 0.0
        %452 = vmatprep.subr.mxu0 0.0
        %453 = vmatpush2.msra.mxu0 0.0
        %454 = vmatprep.subr.mxu0 0.0
        %455 = vmatpush2.msra.mxu0 0.0
        %456 = vmatprep.subr.mxu0 0.0
        %457 = vmatpush2.msra.mxu0 0.0
        %458 = vmatprep.mubr.f32.mxu0 0.0
        %459 = vmatmul.mubr.f32.gmra.mxu0 %v308
        %v460 = vpop.f32.mrf.mxu0
        %v461 = vadd.f32 %v392, %v460
        %v462 = vpop.f32.mrf.mxu0
        %463 = vdwg.mxu0
        %464 = vst.msk [vmem:[%s286] sm:$0xff] %vm306, %v461
        %s465 = scalar_lea.vmem [#allocation5], 64
        %v466 = vld [vmem:[%s465] sm:$0xff]
        %v467 = vld [vmem:[%s465 + $0x8] sm:$0xff]
        %v468 = vld [vmem:[%s465 + $0x10] sm:$0xff]
        %v469 = vld [vmem:[%s465 + $0x18] sm:$0xff]
        %s470 = scalar_lea.vmem %s2, 2
        %v471 = vld [vmem:[%s470] sm:$0x1]
        %v473 = vlaneseq
        %v474 = vshrl.u32 %v473, 7
        %v475 = vsub.s32 0, %v474
        %v476 = vrot.slane %v471, %v475
        %478 = vmatprep.subr.mxu0 0.0
        %479 = vmatpush1.msra.mxu0 0.0
        %480 = vmatprep.subr.mxu0 0.0
        %481 = vmatpush1.msra.mxu0 0.0
        %482 = vmatprep.subr.mxu0 0.0
        %483 = vmatpush1.msra.mxu0 0.0
        %484 = vmatprep.subr.mxu0 0.0
        %485 = vmatpush1.msra.mxu0 0.0
        %486 = vmatprep.subr.mxu0 0.0
        %487 = vmatpush1.msra.mxu0 0.0
        %488 = vmatprep.subr.mxu0 0.0
        %489 = vmatpush1.msra.mxu0 0.0
        %490 = vmatprep.subr.mxu0 0.0
        %491 = vmatpush1.msra.mxu0 0.0
        %492 = vmatprep.subr.mxu0 0.0
        %493 = vmatpush1.msra.mxu0 0.0
        %494 = vmatprep.subr.mxu0 0.0
        %495 = vmatpush1.msra.mxu0 0.0
        %496 = vmatprep.subr.mxu0 0.0
        %497 = vmatpush1.msra.mxu0 0.0
        %498 = vmatprep.subr.mxu0 0.0
        %499 = vmatpush1.msra.mxu0 0.0
        %500 = vmatprep.subr.mxu0 0.0
        %501 = vmatpush1.msra.mxu0 0.0
        %502 = vmatprep.subr.mxu0 0.0
        %503 = vmatpush1.msra.mxu0 %v469
        %504 = vmatprep.subr.mxu0 0.0
        %505 = vmatpush1.msra.mxu0 %v468
        %506 = vmatprep.subr.mxu0 0.0
        %507 = vmatpush1.msra.mxu0 %v467
        %508 = vmatprep.subr.mxu0 0.0
        %509 = vmatpush1.msra.mxu0 %v466
        %510 = vmatprep.subr.mxu0 0.0
        %511 = vmatpush2.msra.mxu0 0.0
        %512 = vmatprep.subr.mxu0 0.0
        %513 = vmatpush2.msra.mxu0 0.0
        %514 = vmatprep.subr.mxu0 0.0
        %515 = vmatpush2.msra.mxu0 0.0
        %516 = vmatprep.subr.mxu0 0.0
        %517 = vmatpush2.msra.mxu0 0.0
        %518 = vmatprep.subr.mxu0 0.0
        %519 = vmatpush2.msra.mxu0 0.0
        %520 = vmatprep.subr.mxu0 0.0
        %521 = vmatpush2.msra.mxu0 0.0
        %522 = vmatprep.subr.mxu0 0.0
        %523 = vmatpush2.msra.mxu0 0.0
        %524 = vmatprep.subr.mxu0 0.0
        %525 = vmatpush2.msra.mxu0 0.0
        %526 = vmatprep.subr.mxu0 0.0
        %527 = vmatpush2.msra.mxu0 0.0
        %528 = vmatprep.subr.mxu0 0.0
        %529 = vmatpush2.msra.mxu0 0.0
        %530 = vmatprep.subr.mxu0 0.0
        %531 = vmatpush2.msra.mxu0 0.0
        %532 = vmatprep.subr.mxu0 0.0
        %533 = vmatpush2.msra.mxu0 0.0
        %534 = vmatprep.subr.mxu0 0.0
        %535 = vmatpush2.msra.mxu0 0.0
        %536 = vmatprep.subr.mxu0 0.0
        %537 = vmatpush2.msra.mxu0 0.0
        %538 = vmatprep.subr.mxu0 0.0
        %539 = vmatpush2.msra.mxu0 0.0
        %540 = vmatprep.subr.mxu0 0.0
        %541 = vmatpush2.msra.mxu0 0.0
        %542 = vmatprep.mubr.f32.mxu0 0.0
        %543 = vmatmul.mubr.f32.gmra.mxu0 %v308
        %v544 = vpop.f32.mrf.mxu0
        %v545 = vadd.f32 %v476, %v544
        %v546 = vpop.f32.mrf.mxu0
        %547 = vdwg.mxu0
        %548 = vst.msk [vmem:[%s293] sm:$0xff] %vm306, %v545
        %s549 = sand.u32 %s119, 1
        %s550 = scalar_lea.sflag [#allocation4], %s549
        %s551 = sand.u32 %s119, 1
        %s552 = smul.addr %s551, 8
        %s553 = scalar_lea.vmem [#allocation7], %s552
        %s554 = sand.u32 %s27, 1
        %s555 = scalar_lea.sflag [#allocation9], %s554
        %s556 = sand.u32 %s147, 1
        %s557 = smul.addr %s556, 8
        %s558 = scalar_lea.vmem [#allocation8], %s557
        %s559 = sand.u32 %s27, 1
        %s560 = scalar_lea.sflag [#allocation9], %s559
        %s561 = sand.u32 %s175, 1
        %s562 = smul.addr %s561, 8
        %s563 = scalar_lea.vmem [#allocation10], %s562
        // Predicated region
        $region41: #{tpu_custom_call.1} parent=31 // pred_check
          %p564 = pneg %p129
        $region42: #{tpu_custom_call.1} parent=31 // pred_check_branch
          %566 = sbr.rel (%p564) target = $region44
        $region43: #{tpu_custom_call.1} parent=31 // pred_region
          %s568 = ssub.s32 128, 128
          %569 = vsyncadd %s550, %s568
          %s570 = sadd.s32 %s32, %s31
          %s571 = smul.addr %s570, 128
          %s572 = scalar_lea.hbm %s3, %s571
          %s574 = sshll.u32 %s553, 4
          %s575 = int_to_ptr.vmem [resolvable:$true] %s574
          %577 = dma.vmem_to_hbm [thread:$0]  %s575, 128, %s572, %s550
        $region44: #{tpu_custom_call.1} parent=31 // pred_fallthru
          _
        // Predicated region
        $region45: #{tpu_custom_call.1} parent=31 // pred_check
          %p578 = pneg %p157
        $region46: #{tpu_custom_call.1} parent=31 // pred_check_branch
          %580 = sbr.rel (%p578) target = $region48
        $region47: #{tpu_custom_call.1} parent=31 // pred_region
          %s582 = ssub.s32 128, 128
          %583 = vsyncadd %s555, %s582
          %s584 = sadd.s32 %s32, %s31
          %s585 = smul.addr %s584, 128
          %s586 = scalar_lea.hbm %s4, %s585
          %s588 = sshll.u32 %s558, 4
          %s589 = int_to_ptr.vmem [resolvable:$true] %s588
          %591 = dma.vmem_to_hbm [thread:$0]  %s589, 128, %s586, %s555
        $region48: #{tpu_custom_call.1} parent=31 // pred_fallthru
          _
        // Predicated region
        $region49: #{tpu_custom_call.1} parent=31 // pred_check
          %p592 = pneg %p185
        $region50: #{tpu_custom_call.1} parent=31 // pred_check_branch
          %594 = sbr.rel (%p592) target = $region52
        $region51: #{tpu_custom_call.1} parent=31 // pred_region
          %s596 = ssub.s32 128, 128
          %597 = vsyncadd %s560, %s596
          %s598 = sadd.s32 %s32, %s31
          %s599 = smul.addr %s598, 128
          %s600 = scalar_lea.hbm %s5, %s599
          %s602 = sshll.u32 %s563, 4
          %s603 = int_to_ptr.vmem [resolvable:$true] %s602
          %605 = dma.vmem_to_hbm [thread:$0]  %s603, 128, %s600, %s560
        $region52: #{tpu_custom_call.1} parent=31 // pred_fallthru
          _
      $region32: #{tpu_custom_call.1} parent=5 // pred_fallthru
        _
      %p606 = scmp.le.s32.totalorder 2, %s22
      // Predicated region
      $region53: #{tpu_custom_call.1} parent=5 // pred_check
        %p607 = pneg %p606
      $region54: #{tpu_custom_call.1} parent=5 // pred_check_branch
        %609 = sbr.rel (%p607) target = $region56
      $region55: #{tpu_custom_call.1} parent=5 // pred_region
        %s610 = ssub.s32 %s22, 2
        // Predicated region
        $region57: #{tpu_custom_call.1} parent=55 // pred_check
          %p611 = pneg %p135
        $region58: #{tpu_custom_call.1} parent=55 // pred_check_branch
          %613 = sbr.rel (%p611) target = $region60
        $region59: #{tpu_custom_call.1} parent=55 // pred_region
          %s614 = sand.u32 %s120, 1
          %s615 = scalar_lea.sflag [#allocation4], %s614
          %s616 = sand.u32 %s120, 1
          %s617 = smul.addr %s616, 8
          %s618 = scalar_lea.vmem [#allocation7], %s617
          %619 = dma.done %s615, 128
        $region60: #{tpu_custom_call.1} parent=55 // pred_fallthru
          _
        // Predicated region
        $region61: #{tpu_custom_call.1} parent=55 // pred_check
          %p620 = pneg %p163
        $region62: #{tpu_custom_call.1} parent=55 // pred_check_branch
          %622 = sbr.rel (%p620) target = $region64
        $region63: #{tpu_custom_call.1} parent=55 // pred_region
          %s623 = sand.u32 %s28, 1
          %s624 = scalar_lea.sflag [#allocation9], %s623
          %s625 = sand.u32 %s148, 1
          %s626 = smul.addr %s625, 8
          %s627 = scalar_lea.vmem [#allocation8], %s626
          %628 = dma.done %s624, 128
        $region64: #{tpu_custom_call.1} parent=55 // pred_fallthru
          _
        // Predicated region
        $region65: #{tpu_custom_call.1} parent=55 // pred_check
          %p629 = pneg %p191
        $region66: #{tpu_custom_call.1} parent=55 // pred_check_branch
          %631 = sbr.rel (%p629) target = $region68
        $region67: #{tpu_custom_call.1} parent=55 // pred_region
          %s632 = sand.u32 %s28, 1
          %s633 = scalar_lea.sflag [#allocation9], %s632
          %s634 = sand.u32 %s176, 1
          %s635 = smul.addr %s634, 8
          %s636 = scalar_lea.vmem [#allocation10], %s635
          %637 = dma.done %s633, 128
        $region68: #{tpu_custom_call.1} parent=55 // pred_fallthru
          _
      $region56: #{tpu_custom_call.1} parent=5 // pred_fallthru
        _
    $region6: #{tpu_custom_call.1} parent=1 // loop_footer
      %s26 = sadd.s32 1, %s22
    $region7: #{tpu_custom_call.1} parent=1 // loop_footer_branch
      %21 = sbr.rel target = $region3
    $region8: #{tpu_custom_call.1} parent=1 // loop_exit
      _
    %638 = vsyncpa [#allocation3], 1
    %s639 = scalar_lea.sflag [#allocation3], 1
    %640 = vsyncpa %s639, 1
    %641 = vsyncpa [#allocation6], 1
    %642 = vsyncpa [#allocation4], 1
    %s643 = scalar_lea.sflag [#allocation4], 1
    %644 = vsyncpa %s643, 1
    %645 = vsyncpa [#allocation9], 1
    %s646 = scalar_lea.sflag [#allocation9], 1
    %647 = vsyncpa %s646, 1

</llo_original>
